<compile_context>
chip_gen: v7x
topology: tpu7x:2x2x1
jax: 0.10.0
libtpu: 0.0.40
codegen_flags: <defaults>
</compile_context>

<pallas_src>
import functools

import jax
import jax.numpy as jnp
from jax.experimental import pallas as pl
from jax.experimental.pallas import tpu as pltpu

IN_DIM = 768
HID_DIM = 256
NUM_EMOTIONS = 6
OUT_PAD = 128          # lane-dense padded classifier width (full unmasked vst)
MAX_TB = 1024          # batch tile cap; f32-x double-buffered tiles ~7 MiB VMEM


def emotion_mlp_kernel(x_ref, w1_ref, b1_ref, w2_ref, b2_ref, out_ref):
    # x_ref:  (TB, 768) f32        w1_ref: (768, 256) bf16   b1_ref: (1, 256) f32
    # w2_ref: (256, 128) bf16      b2_ref: (1, 128)   f32    out_ref: (TB, 128) bf16
    x = x_ref[...].astype(jnp.bfloat16)              # in-kernel cast (no extra HBM pass)
    h = jnp.dot(x, w1_ref[...], preferred_element_type=jnp.float32)
    h = jnp.maximum(h + b1_ref[...], 0.0)            # bias + ReLU in f32
    o = jnp.dot(h.astype(jnp.bfloat16), w2_ref[...],
                preferred_element_type=jnp.float32)
    o = o + b2_ref[...]
    out_ref[...] = o.astype(out_ref.dtype)           # bf16 lane-dense store


def _round_up(n, m):
    return ((n + m - 1) // m) * m


def _choose_tb(B):
    """Batch tile: multiple of 16 (bf16 sublane pairs); >=2 grid steps when it matters."""
    B = max(B, 1)
    if B <= 32:
        return _round_up(B, 16)
    # Aim for at least two grid steps so v7x megacore ("parallel") engages both
    # TensorCores; cap for VMEM (double-buffered f32 x tiles).
    return min(MAX_TB, _round_up((B + 1) // 2, 16))


@functools.partial(jax.jit, static_argnames=("num_emotions",))
def emotion_classifier_forward(x, w1, b1, w2, b2, *, num_emotions=NUM_EMOTIONS):
    """x: (B, 768) float32 -> logits (B, num_emotions) float32.

    w1: (768, 256), b1: (256,) or (1, 256), w2: (256, num_emotions),
    b2: (num_emotions,) or (1, num_emotions). Weights are stored transposed
    relative to nn.Linear (in, out) so the kernel does plain x @ W.
    Dropout is an eval-mode no-op (identity).
    """
    B = x.shape[0]
    if B == 0:
        return jnp.zeros((0, num_emotions), jnp.float32)

    # --- batch tiling (pad B only if needed; padded rows are sliced off)
    tb = _choose_tb(B)
    b_pad = _round_up(B, tb)
    grid_b = b_pad // tb

    x_p = x if b_pad == B else jnp.pad(x, ((0, b_pad - B), (0, 0)))
    x_p = x_p.astype(jnp.float32)

    # --- weight / bias prep (bf16 weights, f32 biases, lane-dense padded out)
    w1_bf = w1.astype(jnp.bfloat16)
    b1_f = jnp.reshape(b1, (1, HID_DIM)).astype(jnp.float32)

    w2_f = jnp.reshape(w2, (HID_DIM, num_emotions)).astype(jnp.bfloat16)
    w2_pad = jnp.zeros((HID_DIM, OUT_PAD), jnp.bfloat16).at[:, :num_emotions].set(w2_f)
    b2_f = jnp.reshape(b2, (1, num_emotions)).astype(jnp.float32)
    b2_pad = jnp.zeros((1, OUT_PAD), jnp.float32).at[:, :num_emotions].set(b2_f)

    flops = 2 * b_pad * (IN_DIM * HID_DIM + HID_DIM * OUT_PAD)
    bytes_accessed = (
        b_pad * IN_DIM * 4            # x read (f32)
        + w1_bf.size * 2 + w2_pad.size * 2
        + b1_f.size * 4 + b2_pad.size * 4
        + b_pad * OUT_PAD * 2         # out write (bf16)
    )

    out_padded = pl.pallas_call(
        emotion_mlp_kernel,
        out_shape=jax.ShapeDtypeStruct((b_pad, OUT_PAD), jnp.bfloat16),
        grid_spec=pltpu.PrefetchScalarGridSpec(
            num_scalar_prefetch=0,
            grid=(grid_b,),
            in_specs=[
                pl.BlockSpec((tb, IN_DIM), lambda i: (i, 0)),        # x streams (f32)
                pl.BlockSpec((IN_DIM, HID_DIM), lambda i: (0, 0)),   # W1 resident
                pl.BlockSpec((1, HID_DIM), lambda i: (0, 0)),        # b1 resident
                pl.BlockSpec((HID_DIM, OUT_PAD), lambda i: (0, 0)),  # W2 resident
                pl.BlockSpec((1, OUT_PAD), lambda i: (0, 0)),        # b2 resident
            ],
            out_specs=pl.BlockSpec((tb, OUT_PAD), lambda i: (i, 0)),
        ),
        compiler_params=pltpu.CompilerParams(
            dimension_semantics=("parallel",),  # v7x: shard batch over both TCs
        ),
        cost_estimate=pl.CostEstimate(
            flops=flops, transcendentals=0, bytes_accessed=bytes_accessed
        ),
    )(x_p, w1_bf, b1_f, w2_pad, b2_pad)

    return out_padded[:B, :num_emotions].astype(jnp.float32)


def init_params(key, num_emotions=NUM_EMOTIONS):
    """Deterministic synthetic params matching nn.Linear shapes.

    PyTorch nn.Linear stores weight as (out, in); we keep the transposed
    (in, out) layout so the kernel does x @ W directly.
    """
    k1, k2, k3, k4 = jax.random.split(key, 4)
    w1 = jax.random.normal(k1, (IN_DIM, HID_DIM), jnp.float32) * 0.02
    b1 = jax.random.normal(k2, (HID_DIM,), jnp.float32) * 0.01
    w2 = jax.random.normal(k3, (HID_DIM, num_emotions), jnp.float32) * 0.02
    b2 = jax.random.normal(k4, (num_emotions,), jnp.float32) * 0.01
    return w1, b1, w2, b2


def reference_forward(x, w1, b1, w2, b2):
    # Reference uses the same bf16-rounded operands (upcast to f32) so the
    # comparison isolates kernel correctness from the intended bf16 quantization.
    xq = x.astype(jnp.bfloat16).astype(jnp.float32)
    w1q = w1.astype(jnp.bfloat16).astype(jnp.float32)
    w2q = w2.astype(jnp.bfloat16).astype(jnp.float32)
    h = jnp.maximum(jnp.dot(xq, w1q) + b1[None, :], 0.0)
    hq = h.astype(jnp.bfloat16).astype(jnp.float32)
    return jnp.dot(hq, w2q) + b2[None, :]


if __name__ == "__main__":
    key = jax.random.PRNGKey(0)
    kx, kp = jax.random.split(key)

    B = 8  # small batch (wrapper also handles large / non-multiple-of-16 B)
    x = jax.random.normal(kx, (B, IN_DIM), jnp.float32)
    w1, b1, w2, b2 = init_params(kp)

    out = emotion_classifier_forward(x, w1, b1, w2, b2)
    out = jax.block_until_ready(out)

    ref = reference_forward(x, w1, b1, w2, b2)
    assert out.shape == (B, NUM_EMOTIONS)
    assert jnp.allclose(out, ref, atol=1e-2, rtol=1e-2), (
        float(jnp.max(jnp.abs(out - ref)))
    )

    print("KERNEL_OK")
</pallas_src>

<mosaic_0001>
module attributes {stable_mosaic.version = 11 : i64} {
  func.func @emotion_mlp_kernel(%arg0: i32, %arg1: memref<16x768xf32, #tpu.memory_space<vmem>>, %arg2: memref<768x256xbf16, #tpu.memory_space<vmem>>, %arg3: memref<1x256xf32, #tpu.memory_space<vmem>>, %arg4: memref<256x128xbf16, #tpu.memory_space<vmem>>, %arg5: memref<1x128xf32, #tpu.memory_space<vmem>>, %arg6: memref<16x128xbf16, #tpu.memory_space<vmem>>) attributes {dimension_semantics = [#tpu.dimension_semantics<parallel>], iteration_bounds = array<i64: 1>, scalar_prefetch = 0 : i64, scratch_operands = 0 : i64, tpu.core_type = #tpu.core_type<tc>, window_params = [{transform_indices = @transform_0, window_bounds = array<i64: 16, 768>}, {pipeline_mode = #tpu.pipeline_mode<synchronous>, transform_indices = @transform_1, window_bounds = array<i64: 768, 256>}, {pipeline_mode = #tpu.pipeline_mode<synchronous>, transform_indices = @transform_2, window_bounds = array<i64: 1, 256>}, {pipeline_mode = #tpu.pipeline_mode<synchronous>, transform_indices = @transform_3, window_bounds = array<i64: 256, 128>}, {pipeline_mode = #tpu.pipeline_mode<synchronous>, transform_indices = @transform_4, window_bounds = array<i64: 1, 128>}, {transform_indices = @transform_5, window_bounds = array<i64: 16, 128>}]} {
    %c0 = arith.constant 0 : index
    %c0_0 = arith.constant 0 : index
    %0 = vector.load %arg1[%c0, %c0_0] : memref<16x768xf32, #tpu.memory_space<vmem>>, vector<16x768xf32>
    %1 = arith.truncf %0 : vector<16x768xf32> to vector<16x768xbf16>
    %c0_1 = arith.constant 0 : index
    %c0_2 = arith.constant 0 : index
    %2 = vector.load %arg2[%c0_1, %c0_2] : memref<768x256xbf16, #tpu.memory_space<vmem>>, vector<768x256xbf16>
    %cst = arith.constant dense<0.000000e+00> : vector<16x256xf32>
    %3 = tpu.matmul %1, %2, %cst {dimension_numbers = #tpu.dot_dimension_numbers<[1], [0], [0], [1], [0, 0, 1, 1], [], []>} : vector<16x768xbf16>, vector<768x256xbf16>, vector<16x256xf32> -> vector<16x256xf32>
    %c0_3 = arith.constant 0 : index
    %c0_4 = arith.constant 0 : index
    %4 = vector.load %arg3[%c0_3, %c0_4] : memref<1x256xf32, #tpu.memory_space<vmem>>, vector<1x256xf32>
    %5 = vector.broadcast %4 : vector<1x256xf32> to vector<16x256xf32>
    %6 = arith.addf %3, %5 : vector<16x256xf32>
    %cst_5 = arith.constant 0.000000e+00 : f32
    %7 = vector.broadcast %cst_5 : f32 to vector<16x256xf32>
    %8 = arith.maximumf %6, %7 : vector<16x256xf32>
    %9 = arith.truncf %8 : vector<16x256xf32> to vector<16x256xbf16>
    %c0_6 = arith.constant 0 : index
    %c0_7 = arith.constant 0 : index
    %10 = vector.load %arg4[%c0_6, %c0_7] : memref<256x128xbf16, #tpu.memory_space<vmem>>, vector<256x128xbf16>
    %cst_8 = arith.constant dense<0.000000e+00> : vector<16x128xf32>
    %11 = tpu.matmul %9, %10, %cst_8 {dimension_numbers = #tpu.dot_dimension_numbers<[1], [0], [0], [1], [0, 0, 1, 1], [], []>} : vector<16x256xbf16>, vector<256x128xbf16>, vector<16x128xf32> -> vector<16x128xf32>
    %c0_9 = arith.constant 0 : index
    %c0_10 = arith.constant 0 : index
    %12 = vector.load %arg5[%c0_9, %c0_10] : memref<1x128xf32, #tpu.memory_space<vmem>>, vector<1x128xf32>
    %13 = vector.broadcast %12 : vector<1x128xf32> to vector<16x128xf32>
    %14 = arith.addf %11, %13 : vector<16x128xf32>
    %15 = arith.truncf %14 : vector<16x128xf32> to vector<16x128xbf16>
    %c0_11 = arith.constant 0 : index
    %c0_12 = arith.constant 0 : index
    %16 = vector.load %arg6[%c0_11, %c0_12] : memref<16x128xbf16, #tpu.memory_space<vmem>>, vector<16x128xbf16>
    tpu.vector_store %arg6[%c0_11, %c0_12], %15 {strides = array<i32>} : memref<16x128xbf16, #tpu.memory_space<vmem>>, vector<16x128xbf16>,
    return
  }
  func.func @transform_0(%arg0: i32) -> (i32, i32) {
    %c0_i32 = arith.constant 0 : i32
    %c0_i32_0 = arith.constant 0 : i32
    return %arg0, %c0_i32 : i32, i32
  }
  func.func @transform_1(%arg0: i32) -> (i32, i32) {
    %c0_i32 = arith.constant 0 : i32
    %c0_i32_0 = arith.constant 0 : i32
    %c0_i32_1 = arith.constant 0 : i32
    return %c0_i32, %c0_i32_0 : i32, i32
  }
  func.func @transform_2(%arg0: i32) -> (i32, i32) {
    %c0_i32 = arith.constant 0 : i32
    %c0_i32_0 = arith.constant 0 : i32
    %c0_i32_1 = arith.constant 0 : i32
    return %c0_i32, %c0_i32_0 : i32, i32
  }
  func.func @transform_3(%arg0: i32) -> (i32, i32) {
    %c0_i32 = arith.constant 0 : i32
    %c0_i32_0 = arith.constant 0 : i32
    %c0_i32_1 = arith.constant 0 : i32
    return %c0_i32, %c0_i32_0 : i32, i32
  }
  func.func @transform_4(%arg0: i32) -> (i32, i32) {
    %c0_i32 = arith.constant 0 : i32
    %c0_i32_0 = arith.constant 0 : i32
    %c0_i32_1 = arith.constant 0 : i32
    return %c0_i32, %c0_i32_0 : i32, i32
  }
  func.func @transform_5(%arg0: i32) -> (i32, i32) {
    %c0_i32 = arith.constant 0 : i32
    %c0_i32_0 = arith.constant 0 : i32
    return %arg0, %c0_i32 : i32, i32
  }
}

</mosaic_0001>

<llo_original>
// kernel: emotion_classifier_forward.1
$region0: #{emotion_classifier_forward.1}
  #allocation0 [shape = 'u32[]', space=smem, size = 0x4, offset = 0x4, fixed_abs, tag = 'smem constant byte address 0x4 - core index']
  #allocation1 [shape = 'u32[144,128]{1,0:T(1,128)}', space=vmem, size = 0x12000, scoped, tag = 'internal scratch']
  %s0 = inlined_call_operand.vmem [shape: f32[16,768], index: 0, kind: input, shape index: {}]
  %s1 = inlined_call_operand.vmem [shape: bf16[768,256], index: 1, kind: input, shape index: {}]
  %s2 = inlined_call_operand.vmem [shape: f32[1,256], index: 2, kind: input, shape index: {}]
  %s3 = inlined_call_operand.vmem [shape: bf16[256,128], index: 3, kind: input, shape index: {}]
  %s4 = inlined_call_operand.vmem [shape: f32[1,128], index: 4, kind: input, shape index: {}]
  %s5 = inlined_call_operand.vmem [shape: bf16[16,128], index: 5, kind: output, shape index: {}]
  %s6 = sld [smem:[#allocation0]]
  $region30: #{emotion_classifier_forward.1} parent=0
    _
  %s8 = ssub.s32 1, %s6
  %s9 = scalar_select 0, %s8, %s6
  // Predicated region
  $region2: #{emotion_classifier_forward.1} parent=0 // pred_check
    _
  $region3: #{emotion_classifier_forward.1} parent=0 // pred_check_branch
    %11 = sbr.rel (0) target = $region5
  $region4: #{emotion_classifier_forward.1} parent=0 // pred_region
    _
  $region5: #{emotion_classifier_forward.1} parent=0 // pred_fallthru
    _
  // Predicated region
  $region6: #{emotion_classifier_forward.1} parent=0 // pred_check
    _
  $region7: #{emotion_classifier_forward.1} parent=0 // pred_check_branch
    %13 = sbr.rel (0) target = $region9
  $region8: #{emotion_classifier_forward.1} parent=0 // pred_region
    _
  $region9: #{emotion_classifier_forward.1} parent=0 // pred_fallthru
    _
  // Predicated region
  $region10: #{emotion_classifier_forward.1} parent=0 // pred_check
    _
  $region11: #{emotion_classifier_forward.1} parent=0 // pred_check_branch
    %15 = sbr.rel (0) target = $region13
  $region12: #{emotion_classifier_forward.1} parent=0 // pred_region
    _
  $region13: #{emotion_classifier_forward.1} parent=0 // pred_fallthru
    _
  // Predicated region
  $region14: #{emotion_classifier_forward.1} parent=0 // pred_check
    _
  $region15: #{emotion_classifier_forward.1} parent=0 // pred_check_branch
    %17 = sbr.rel (0) target = $region17
  $region16: #{emotion_classifier_forward.1} parent=0 // pred_region
    _
  $region17: #{emotion_classifier_forward.1} parent=0 // pred_fallthru
    _
  // Predicated region
  $region18: #{emotion_classifier_forward.1} parent=0 // pred_check
    _
  $region19: #{emotion_classifier_forward.1} parent=0 // pred_check_branch
    %19 = sbr.rel (0) target = $region21
  $region20: #{emotion_classifier_forward.1} parent=0 // pred_region
    _
  $region21: #{emotion_classifier_forward.1} parent=0 // pred_fallthru
    _
  %v21 = vld [vmem:[%s0] sm:$0xff]
  %v22 = vld [vmem:[%s0 + $0x8] sm:$0xff]
  %v23 = vld [vmem:[%s0 + $0x10] sm:$0xff]
  %v24 = vld [vmem:[%s0 + $0x18] sm:$0xff]
  %v25 = vld [vmem:[%s0 + $0x20] sm:$0xff]
  %v26 = vld [vmem:[%s0 + $0x28] sm:$0xff]
  %v27 = vld [vmem:[%s0 + $0x30] sm:$0xff]
  %v28 = vld [vmem:[%s0 + $0x38] sm:$0xff]
  %v29 = vld [vmem:[%s0 + $0x40] sm:$0xff]
  %v30 = vld [vmem:[%s0 + $0x48] sm:$0xff]
  %v31 = vld [vmem:[%s0 + $0x50] sm:$0xff]
  %v32 = vld [vmem:[%s0 + $0x58] sm:$0xff]
  %v33 = vpack.c.bf16 %v27, %v21
  %v34 = vpack.c.bf16 %v28, %v22
  %v35 = vpack.c.bf16 %v29, %v23
  %v36 = vpack.c.bf16 %v30, %v24
  %v37 = vpack.c.bf16 %v31, %v25
  %v38 = vpack.c.bf16 %v32, %v26
  %v39 = vld [vmem:[%s1] sm:$0xff]
  %v40 = vld [vmem:[%s1 + $0x8] sm:$0xff]
  %v41 = vld [vmem:[%s1 + $0x10] sm:$0xff]
  %v42 = vld [vmem:[%s1 + $0x18] sm:$0xff]
  %v43 = vld [vmem:[%s1 + $0x20] sm:$0xff]
  %v44 = vld [vmem:[%s1 + $0x28] sm:$0xff]
  %v45 = vld [vmem:[%s1 + $0x30] sm:$0xff]
  %v46 = vld [vmem:[%s1 + $0x38] sm:$0xff]
  %v47 = vld [vmem:[%s1 + $0x40] sm:$0xff]
  %v48 = vld [vmem:[%s1 + $0x48] sm:$0xff]
  %v49 = vld [vmem:[%s1 + $0x50] sm:$0xff]
  %v50 = vld [vmem:[%s1 + $0x58] sm:$0xff]
  %v51 = vld [vmem:[%s1 + $0x60] sm:$0xff]
  %v52 = vld [vmem:[%s1 + $0x68] sm:$0xff]
  %v53 = vld [vmem:[%s1 + $0x70] sm:$0xff]
  %v54 = vld [vmem:[%s1 + $0x78] sm:$0xff]
  %v55 = vld [vmem:[%s1 + $0x80] sm:$0xff]
  %v56 = vld [vmem:[%s1 + $0x88] sm:$0xff]
  %v57 = vld [vmem:[%s1 + $0x90] sm:$0xff]
  %v58 = vld [vmem:[%s1 + $0x98] sm:$0xff]
  %v59 = vld [vmem:[%s1 + $0xa0] sm:$0xff]
  %v60 = vld [vmem:[%s1 + $0xa8] sm:$0xff]
  %v61 = vld [vmem:[%s1 + $0xb0] sm:$0xff]
  %v62 = vld [vmem:[%s1 + $0xb8] sm:$0xff]
  %v63 = vld [vmem:[%s1 + $0xc0] sm:$0xff]
  %v64 = vld [vmem:[%s1 + $0xc8] sm:$0xff]
  %v65 = vld [vmem:[%s1 + $0xd0] sm:$0xff]
  %v66 = vld [vmem:[%s1 + $0xd8] sm:$0xff]
  %v67 = vld [vmem:[%s1 + $0xe0] sm:$0xff]
  %v68 = vld [vmem:[%s1 + $0xe8] sm:$0xff]
  %v69 = vld [vmem:[%s1 + $0xf0] sm:$0xff]
  %v70 = vld [vmem:[%s1 + $0xf8] sm:$0xff]
  %v71 = vld [vmem:[%s1 + $0x100] sm:$0xff]
  %v72 = vld [vmem:[%s1 + $0x108] sm:$0xff]
  %v73 = vld [vmem:[%s1 + $0x110] sm:$0xff]
  %v74 = vld [vmem:[%s1 + $0x118] sm:$0xff]
  %v75 = vld [vmem:[%s1 + $0x120] sm:$0xff]
  %v76 = vld [vmem:[%s1 + $0x128] sm:$0xff]
  %v77 = vld [vmem:[%s1 + $0x130] sm:$0xff]
  %v78 = vld [vmem:[%s1 + $0x138] sm:$0xff]
  %v79 = vld [vmem:[%s1 + $0x140] sm:$0xff]
  %v80 = vld [vmem:[%s1 + $0x148] sm:$0xff]
  %v81 = vld [vmem:[%s1 + $0x150] sm:$0xff]
  %v82 = vld [vmem:[%s1 + $0x158] sm:$0xff]
  %v83 = vld [vmem:[%s1 + $0x160] sm:$0xff]
  %v84 = vld [vmem:[%s1 + $0x168] sm:$0xff]
  %v85 = vld [vmem:[%s1 + $0x170] sm:$0xff]
  %v86 = vld [vmem:[%s1 + $0x178] sm:$0xff]
  %v87 = vld [vmem:[%s1 + $0x180] sm:$0xff]
  %v88 = vld [vmem:[%s1 + $0x188] sm:$0xff]
  %v89 = vld [vmem:[%s1 + $0x190] sm:$0xff]
  %v90 = vld [vmem:[%s1 + $0x198] sm:$0xff]
  %v91 = vld [vmem:[%s1 + $0x1a0] sm:$0xff]
  %v92 = vld [vmem:[%s1 + $0x1a8] sm:$0xff]
  %v93 = vld [vmem:[%s1 + $0x1b0] sm:$0xff]
  %v94 = vld [vmem:[%s1 + $0x1b8] sm:$0xff]
  %v95 = vld [vmem:[%s1 + $0x1c0] sm:$0xff]
  %v96 = vld [vmem:[%s1 + $0x1c8] sm:$0xff]
  %v97 = vld [vmem:[%s1 + $0x1d0] sm:$0xff]
  %v98 = vld [vmem:[%s1 + $0x1d8] sm:$0xff]
  %v99 = vld [vmem:[%s1 + $0x1e0] sm:$0xff]
  %v100 = vld [vmem:[%s1 + $0x1e8] sm:$0xff]
  %v101 = vld [vmem:[%s1 + $0x1f0] sm:$0xff]
  %v102 = vld [vmem:[%s1 + $0x1f8] sm:$0xff]
  %v103 = vld [vmem:[%s1 + $0x200] sm:$0xff]
  %v104 = vld [vmem:[%s1 + $0x208] sm:$0xff]
  %v105 = vld [vmem:[%s1 + $0x210] sm:$0xff]
  %v106 = vld [vmem:[%s1 + $0x218] sm:$0xff]
  %v107 = vld [vmem:[%s1 + $0x220] sm:$0xff]
  %v108 = vld [vmem:[%s1 + $0x228] sm:$0xff]
  %v109 = vld [vmem:[%s1 + $0x230] sm:$0xff]
  %v110 = vld [vmem:[%s1 + $0x238] sm:$0xff]
  %v111 = vld [vmem:[%s1 + $0x240] sm:$0xff]
  %v112 = vld [vmem:[%s1 + $0x248] sm:$0xff]
  %v113 = vld [vmem:[%s1 + $0x250] sm:$0xff]
  %v114 = vld [vmem:[%s1 + $0x258] sm:$0xff]
  %v115 = vld [vmem:[%s1 + $0x260] sm:$0xff]
  %v116 = vld [vmem:[%s1 + $0x268] sm:$0xff]
  %v117 = vld [vmem:[%s1 + $0x270] sm:$0xff]
  %v118 = vld [vmem:[%s1 + $0x278] sm:$0xff]
  %v119 = vld [vmem:[%s1 + $0x280] sm:$0xff]
  %v120 = vld [vmem:[%s1 + $0x288] sm:$0xff]
  %v121 = vld [vmem:[%s1 + $0x290] sm:$0xff]
  %v122 = vld [vmem:[%s1 + $0x298] sm:$0xff]
  %v123 = vld [vmem:[%s1 + $0x2a0] sm:$0xff]
  %v124 = vld [vmem:[%s1 + $0x2a8] sm:$0xff]
  %v125 = vld [vmem:[%s1 + $0x2b0] sm:$0xff]
  %v126 = vld [vmem:[%s1 + $0x2b8] sm:$0xff]
  %v127 = vld [vmem:[%s1 + $0x2c0] sm:$0xff]
  %v128 = vld [vmem:[%s1 + $0x2c8] sm:$0xff]
  %v129 = vld [vmem:[%s1 + $0x2d0] sm:$0xff]
  %v130 = vld [vmem:[%s1 + $0x2d8] sm:$0xff]
  %v131 = vld [vmem:[%s1 + $0x2e0] sm:$0xff]
  %v132 = vld [vmem:[%s1 + $0x2e8] sm:$0xff]
  %v133 = vld [vmem:[%s1 + $0x2f0] sm:$0xff]
  %v134 = vld [vmem:[%s1 + $0x2f8] sm:$0xff]
  %v135 = vld [vmem:[%s2] sm:$0x3]
  %v137 = vlaneseq
  %v138 = vshrl.u32 %v137, 7
  %v139 = vsub.s32 0, %v138
  %v140 = vrot.slane %v135, %v139
  %v141 = vlaneseq
  %v142 = vshrl.u32 %v141, 7
  %v143 = vsub.s32 1, %v142
  %v144 = vrot.slane %v135, %v143
  %v243 = vunpack.c.l.b16 %v39
  %v244 = vunpack.c.h.b16 %v39
  %v245 = vunpack.c.l.b16 %v40
  %v246 = vunpack.c.h.b16 %v40
  %v247 = vunpack.c.l.b16 %v41
  %v248 = vunpack.c.h.b16 %v41
  %v249 = vunpack.c.l.b16 %v42
  %v250 = vunpack.c.h.b16 %v42
  %v251 = vunpack.c.l.b16 %v43
  %v252 = vunpack.c.h.b16 %v43
  %v253 = vunpack.c.l.b16 %v44
  %v254 = vunpack.c.h.b16 %v44
  %v255 = vunpack.c.l.b16 %v45
  %v256 = vunpack.c.h.b16 %v45
  %v257 = vunpack.c.l.b16 %v46
  %v258 = vunpack.c.h.b16 %v46
  %v259 = vunpack.c.l.b16 %v47
  %v260 = vunpack.c.h.b16 %v47
  %v261 = vunpack.c.l.b16 %v48
  %v262 = vunpack.c.h.b16 %v48
  %v263 = vunpack.c.l.b16 %v49
  %v264 = vunpack.c.h.b16 %v49
  %v265 = vunpack.c.l.b16 %v50
  %v266 = vunpack.c.h.b16 %v50
  %v267 = vunpack.c.l.b16 %v51
  %v268 = vunpack.c.h.b16 %v51
  %v269 = vunpack.c.l.b16 %v52
  %v270 = vunpack.c.h.b16 %v52
  %v271 = vunpack.c.l.b16 %v53
  %v272 = vunpack.c.h.b16 %v53
  %v273 = vunpack.c.l.b16 %v54
  %v274 = vunpack.c.h.b16 %v54
  %v275 = vunpack.c.l.b16 %v55
  %v276 = vunpack.c.h.b16 %v55
  %v277 = vunpack.c.l.b16 %v56
  %v278 = vunpack.c.h.b16 %v56
  %v279 = vunpack.c.l.b16 %v57
  %v280 = vunpack.c.h.b16 %v57
  %v281 = vunpack.c.l.b16 %v58
  %v282 = vunpack.c.h.b16 %v58
  %v283 = vunpack.c.l.b16 %v59
  %v284 = vunpack.c.h.b16 %v59
  %v285 = vunpack.c.l.b16 %v60
  %v286 = vunpack.c.h.b16 %v60
  %v287 = vunpack.c.l.b16 %v61
  %v288 = vunpack.c.h.b16 %v61
  %v289 = vunpack.c.l.b16 %v62
  %v290 = vunpack.c.h.b16 %v62
  %v291 = vunpack.c.l.b16 %v63
  %v292 = vunpack.c.h.b16 %v63
  %v293 = vunpack.c.l.b16 %v64
  %v294 = vunpack.c.h.b16 %v64
  %v295 = vunpack.c.l.b16 %v65
  %v296 = vunpack.c.h.b16 %v65
  %v297 = vunpack.c.l.b16 %v66
  %v298 = vunpack.c.h.b16 %v66
  %v299 = vunpack.c.l.b16 %v67
  %v300 = vunpack.c.h.b16 %v67
  %v301 = vunpack.c.l.b16 %v68
  %v302 = vunpack.c.h.b16 %v68
  %v303 = vunpack.c.l.b16 %v69
  %v304 = vunpack.c.h.b16 %v69
  %v305 = vunpack.c.l.b16 %v70
  %v306 = vunpack.c.h.b16 %v70
  %v307 = vunpack.c.l.b16 %v71
  %v308 = vunpack.c.h.b16 %v71
  %v309 = vunpack.c.l.b16 %v72
  %v310 = vunpack.c.h.b16 %v72
  %v311 = vunpack.c.l.b16 %v73
  %v312 = vunpack.c.h.b16 %v73
  %v313 = vunpack.c.l.b16 %v74
  %v314 = vunpack.c.h.b16 %v74
  %v315 = vunpack.c.l.b16 %v75
  %v316 = vunpack.c.h.b16 %v75
  %v317 = vunpack.c.l.b16 %v76
  %v318 = vunpack.c.h.b16 %v76
  %v319 = vunpack.c.l.b16 %v77
  %v320 = vunpack.c.h.b16 %v77
  %v321 = vunpack.c.l.b16 %v78
  %v322 = vunpack.c.h.b16 %v78
  %v323 = vunpack.c.l.b16 %v79
  %v324 = vunpack.c.h.b16 %v79
  %v325 = vunpack.c.l.b16 %v80
  %v326 = vunpack.c.h.b16 %v80
  %v327 = vunpack.c.l.b16 %v81
  %v328 = vunpack.c.h.b16 %v81
  %v329 = vunpack.c.l.b16 %v82
  %v330 = vunpack.c.h.b16 %v82
  %v331 = vunpack.c.l.b16 %v83
  %v332 = vunpack.c.h.b16 %v83
  %v333 = vunpack.c.l.b16 %v84
  %v334 = vunpack.c.h.b16 %v84
  %v335 = vunpack.c.l.b16 %v85
  %v336 = vunpack.c.h.b16 %v85
  %v337 = vunpack.c.l.b16 %v86
  %v338 = vunpack.c.h.b16 %v86
  %v339 = vunpack.c.l.b16 %v87
  %v340 = vunpack.c.h.b16 %v87
  %v341 = vunpack.c.l.b16 %v88
  %v342 = vunpack.c.h.b16 %v88
  %v343 = vunpack.c.l.b16 %v89
  %v344 = vunpack.c.h.b16 %v89
  %v345 = vunpack.c.l.b16 %v90
  %v346 = vunpack.c.h.b16 %v90
  %v347 = vunpack.c.l.b16 %v91
  %v348 = vunpack.c.h.b16 %v91
  %v349 = vunpack.c.l.b16 %v92
  %v350 = vunpack.c.h.b16 %v92
  %v351 = vunpack.c.l.b16 %v93
  %v352 = vunpack.c.h.b16 %v93
  %v353 = vunpack.c.l.b16 %v94
  %v354 = vunpack.c.h.b16 %v94
  %v355 = vunpack.c.l.b16 %v95
  %v356 = vunpack.c.h.b16 %v95
  %v357 = vunpack.c.l.b16 %v96
  %v358 = vunpack.c.h.b16 %v96
  %v359 = vunpack.c.l.b16 %v97
  %v360 = vunpack.c.h.b16 %v97
  %v361 = vunpack.c.l.b16 %v98
  %v362 = vunpack.c.h.b16 %v98
  %v363 = vunpack.c.l.b16 %v99
  %v364 = vunpack.c.h.b16 %v99
  %v365 = vunpack.c.l.b16 %v100
  %v366 = vunpack.c.h.b16 %v100
  %v367 = vunpack.c.l.b16 %v101
  %v368 = vunpack.c.h.b16 %v101
  %v369 = vunpack.c.l.b16 %v102
  %v370 = vunpack.c.h.b16 %v102
  %v371 = vunpack.c.l.b16 %v103
  %v372 = vunpack.c.h.b16 %v103
  %v373 = vunpack.c.l.b16 %v104
  %v374 = vunpack.c.h.b16 %v104
  %v375 = vunpack.c.l.b16 %v105
  %v376 = vunpack.c.h.b16 %v105
  %v377 = vunpack.c.l.b16 %v106
  %v378 = vunpack.c.h.b16 %v106
  %v379 = vunpack.c.l.b16 %v107
  %v380 = vunpack.c.h.b16 %v107
  %v381 = vunpack.c.l.b16 %v108
  %v382 = vunpack.c.h.b16 %v108
  %v383 = vunpack.c.l.b16 %v109
  %v384 = vunpack.c.h.b16 %v109
  %v385 = vunpack.c.l.b16 %v110
  %v386 = vunpack.c.h.b16 %v110
  %v387 = vunpack.c.l.b16 %v111
  %v388 = vunpack.c.h.b16 %v111
  %v389 = vunpack.c.l.b16 %v112
  %v390 = vunpack.c.h.b16 %v112
  %v391 = vunpack.c.l.b16 %v113
  %v392 = vunpack.c.h.b16 %v113
  %v393 = vunpack.c.l.b16 %v114
  %v394 = vunpack.c.h.b16 %v114
  %v395 = vunpack.c.l.b16 %v115
  %v396 = vunpack.c.h.b16 %v115
  %v397 = vunpack.c.l.b16 %v116
  %v398 = vunpack.c.h.b16 %v116
  %v399 = vunpack.c.l.b16 %v117
  %v400 = vunpack.c.h.b16 %v117
  %v401 = vunpack.c.l.b16 %v118
  %v402 = vunpack.c.h.b16 %v118
  %v403 = vunpack.c.l.b16 %v119
  %v404 = vunpack.c.h.b16 %v119
  %v405 = vunpack.c.l.b16 %v120
  %v406 = vunpack.c.h.b16 %v120
  %v407 = vunpack.c.l.b16 %v121
  %v408 = vunpack.c.h.b16 %v121
  %v409 = vunpack.c.l.b16 %v122
  %v410 = vunpack.c.h.b16 %v122
  %v411 = vunpack.c.l.b16 %v123
  %v412 = vunpack.c.h.b16 %v123
  %v413 = vunpack.c.l.b16 %v124
  %v414 = vunpack.c.h.b16 %v124
  %v415 = vunpack.c.l.b16 %v125
  %v416 = vunpack.c.h.b16 %v125
  %v417 = vunpack.c.l.b16 %v126
  %v418 = vunpack.c.h.b16 %v126
  %v419 = vunpack.c.l.b16 %v127
  %v420 = vunpack.c.h.b16 %v127
  %v421 = vunpack.c.l.b16 %v128
  %v422 = vunpack.c.h.b16 %v128
  %v423 = vunpack.c.l.b16 %v129
  %v424 = vunpack.c.h.b16 %v129
  %v425 = vunpack.c.l.b16 %v130
  %v426 = vunpack.c.h.b16 %v130
  %v427 = vunpack.c.l.b16 %v131
  %v428 = vunpack.c.h.b16 %v131
  %v429 = vunpack.c.l.b16 %v132
  %v430 = vunpack.c.h.b16 %v132
  %v431 = vunpack.c.l.b16 %v133
  %v432 = vunpack.c.h.b16 %v133
  %v433 = vunpack.c.l.b16 %v134
  %v434 = vunpack.c.h.b16 %v134
  %v435 = vpack.c.b16 %v245, %v243
  %v436 = vpack.c.b16 %v246, %v244
  %v437 = vpack.c.b16 %v249, %v247
  %v438 = vpack.c.b16 %v250, %v248
  %v439 = vpack.c.b16 %v253, %v251
  %v440 = vpack.c.b16 %v254, %v252
  %v441 = vpack.c.b16 %v257, %v255
  %v442 = vpack.c.b16 %v258, %v256
  %v443 = vpack.c.b16 %v261, %v259
  %v444 = vpack.c.b16 %v262, %v260
  %v445 = vpack.c.b16 %v265, %v263
  %v446 = vpack.c.b16 %v266, %v264
  %v447 = vpack.c.b16 %v269, %v267
  %v448 = vpack.c.b16 %v270, %v268
  %v449 = vpack.c.b16 %v273, %v271
  %v450 = vpack.c.b16 %v274, %v272
  %v451 = vpack.c.b16 %v277, %v275
  %v452 = vpack.c.b16 %v278, %v276
  %v453 = vpack.c.b16 %v281, %v279
  %v454 = vpack.c.b16 %v282, %v280
  %v455 = vpack.c.b16 %v285, %v283
  %v456 = vpack.c.b16 %v286, %v284
  %v457 = vpack.c.b16 %v289, %v287
  %v458 = vpack.c.b16 %v290, %v288
  %v459 = vpack.c.b16 %v293, %v291
  %v460 = vpack.c.b16 %v294, %v292
  %v461 = vpack.c.b16 %v297, %v295
  %v462 = vpack.c.b16 %v298, %v296
  %v463 = vpack.c.b16 %v301, %v299
  %v464 = vpack.c.b16 %v302, %v300
  %v465 = vpack.c.b16 %v305, %v303
  %v466 = vpack.c.b16 %v306, %v304
  %v467 = vpack.c.b16 %v309, %v307
  %v468 = vpack.c.b16 %v310, %v308
  %v469 = vpack.c.b16 %v313, %v311
  %v470 = vpack.c.b16 %v314, %v312
  %v471 = vpack.c.b16 %v317, %v315
  %v472 = vpack.c.b16 %v318, %v316
  %v473 = vpack.c.b16 %v321, %v319
  %v474 = vpack.c.b16 %v322, %v320
  %v475 = vpack.c.b16 %v325, %v323
  %v476 = vpack.c.b16 %v326, %v324
  %v477 = vpack.c.b16 %v329, %v327
  %v478 = vpack.c.b16 %v330, %v328
  %v479 = vpack.c.b16 %v333, %v331
  %v480 = vpack.c.b16 %v334, %v332
  %v481 = vpack.c.b16 %v337, %v335
  %v482 = vpack.c.b16 %v338, %v336
  %v483 = vpack.c.b16 %v341, %v339
  %v484 = vpack.c.b16 %v342, %v340
  %v485 = vpack.c.b16 %v345, %v343
  %v486 = vpack.c.b16 %v346, %v344
  %v487 = vpack.c.b16 %v349, %v347
  %v488 = vpack.c.b16 %v350, %v348
  %v489 = vpack.c.b16 %v353, %v351
  %v490 = vpack.c.b16 %v354, %v352
  %v491 = vpack.c.b16 %v357, %v355
  %v492 = vpack.c.b16 %v358, %v356
  %v493 = vpack.c.b16 %v361, %v359
  %v494 = vpack.c.b16 %v362, %v360
  %v495 = vpack.c.b16 %v365, %v363
  %v496 = vpack.c.b16 %v366, %v364
  %v497 = vpack.c.b16 %v369, %v367
  %v498 = vpack.c.b16 %v370, %v368
  %v499 = vpack.c.b16 %v373, %v371
  %v500 = vpack.c.b16 %v374, %v372
  %v501 = vpack.c.b16 %v377, %v375
  %v502 = vpack.c.b16 %v378, %v376
  %v503 = vpack.c.b16 %v381, %v379
  %v504 = vpack.c.b16 %v382, %v380
  %v505 = vpack.c.b16 %v385, %v383
  %v506 = vpack.c.b16 %v386, %v384
  %v507 = vpack.c.b16 %v389, %v387
  %v508 = vpack.c.b16 %v390, %v388
  %v509 = vpack.c.b16 %v393, %v391
  %v510 = vpack.c.b16 %v394, %v392
  %v511 = vpack.c.b16 %v397, %v395
  %v512 = vpack.c.b16 %v398, %v396
  %v513 = vpack.c.b16 %v401, %v399
  %v514 = vpack.c.b16 %v402, %v400
  %v515 = vpack.c.b16 %v405, %v403
  %v516 = vpack.c.b16 %v406, %v404
  %v517 = vpack.c.b16 %v409, %v407
  %v518 = vpack.c.b16 %v410, %v408
  %v519 = vpack.c.b16 %v413, %v411
  %v520 = vpack.c.b16 %v414, %v412
  %v521 = vpack.c.b16 %v417, %v415
  %v522 = vpack.c.b16 %v418, %v416
  %v523 = vpack.c.b16 %v421, %v419
  %v524 = vpack.c.b16 %v422, %v420
  %v525 = vpack.c.b16 %v425, %v423
  %v526 = vpack.c.b16 %v426, %v424
  %v527 = vpack.c.b16 %v429, %v427
  %v528 = vpack.c.b16 %v430, %v428
  %v529 = vpack.c.b16 %v433, %v431
  %v530 = vpack.c.b16 %v434, %v432
  %627 = vmatprep.subr.bf16.mxu0 %v436
  %628 = vmatpush1.bf16.msra.mxu0 %v435
  %629 = vmatprep.subr.bf16.mxu0 %v438
  %630 = vmatpush1.bf16.msra.mxu0 %v437
  %631 = vmatprep.subr.bf16.mxu0 %v440
  %632 = vmatpush1.bf16.msra.mxu0 %v439
  %633 = vmatprep.subr.bf16.mxu0 %v442
  %634 = vmatpush1.bf16.msra.mxu0 %v441
  %635 = vmatprep.subr.bf16.mxu0 %v444
  %636 = vmatpush1.bf16.msra.mxu0 %v443
  %637 = vmatprep.subr.bf16.mxu0 %v446
  %638 = vmatpush1.bf16.msra.mxu0 %v445
  %639 = vmatprep.subr.bf16.mxu0 %v448
  %640 = vmatpush1.bf16.msra.mxu0 %v447
  %641 = vmatprep.subr.bf16.mxu0 %v450
  %642 = vmatpush1.bf16.msra.mxu0 %v449
  %643 = vmatprep.subr.bf16.mxu0 %v452
  %644 = vmatpush1.bf16.msra.mxu0 %v451
  %645 = vmatprep.subr.bf16.mxu0 %v454
  %646 = vmatpush1.bf16.msra.mxu0 %v453
  %647 = vmatprep.subr.bf16.mxu0 %v456
  %648 = vmatpush1.bf16.msra.mxu0 %v455
  %649 = vmatprep.subr.bf16.mxu0 %v458
  %650 = vmatpush1.bf16.msra.mxu0 %v457
  %651 = vmatprep.subr.bf16.mxu0 %v460
  %652 = vmatpush1.bf16.msra.mxu0 %v459
  %653 = vmatprep.subr.bf16.mxu0 %v462
  %654 = vmatpush1.bf16.msra.mxu0 %v461
  %655 = vmatprep.subr.bf16.mxu0 %v464
  %656 = vmatpush1.bf16.msra.mxu0 %v463
  %657 = vmatprep.subr.bf16.mxu0 %v466
  %658 = vmatpush1.bf16.msra.mxu0 %v465
  %659 = vmatprep.mubr.bf16.mxu0 %v34
  %660 = vmatmul.mubr.bf16.gmra.mrb[0].mxu0 %v33
  %v661 = vpop.f32.mrb[0].mxu0
  %v662 = vadd.f32 %v140, %v661
  %v663 = vpop.f32.mrb[0].mxu0
  %v664 = vadd.f32 %v144, %v663
  %v665 = vpop.f32.mrb[0].mxu0
  %v666 = vadd.f32 %v140, %v665
  %v667 = vpop.f32.mrb[0].mxu0
  %v668 = vadd.f32 %v144, %v667
  %669 = vdwg.mxu0
  %670 = vmatprep.subr.bf16.mxu0 %v468
  %671 = vmatpush1.bf16.msra.mxu0 %v467
  %672 = vmatprep.subr.bf16.mxu0 %v470
  %673 = vmatpush1.bf16.msra.mxu0 %v469
  %674 = vmatprep.subr.bf16.mxu0 %v472
  %675 = vmatpush1.bf16.msra.mxu0 %v471
  %676 = vmatprep.subr.bf16.mxu0 %v474
  %677 = vmatpush1.bf16.msra.mxu0 %v473
  %678 = vmatprep.subr.bf16.mxu0 %v476
  %679 = vmatpush1.bf16.msra.mxu0 %v475
  %680 = vmatprep.subr.bf16.mxu0 %v478
  %681 = vmatpush1.bf16.msra.mxu0 %v477
  %682 = vmatprep.subr.bf16.mxu0 %v480
  %683 = vmatpush1.bf16.msra.mxu0 %v479
  %684 = vmatprep.subr.bf16.mxu0 %v482
  %685 = vmatpush1.bf16.msra.mxu0 %v481
  %686 = vmatprep.subr.bf16.mxu0 %v484
  %687 = vmatpush1.bf16.msra.mxu0 %v483
  %688 = vmatprep.subr.bf16.mxu0 %v486
  %689 = vmatpush1.bf16.msra.mxu0 %v485
  %690 = vmatprep.subr.bf16.mxu0 %v488
  %691 = vmatpush1.bf16.msra.mxu0 %v487
  %692 = vmatprep.subr.bf16.mxu0 %v490
  %693 = vmatpush1.bf16.msra.mxu0 %v489
  %694 = vmatprep.subr.bf16.mxu0 %v492
  %695 = vmatpush1.bf16.msra.mxu0 %v491
  %696 = vmatprep.subr.bf16.mxu0 %v494
  %697 = vmatpush1.bf16.msra.mxu0 %v493
  %698 = vmatprep.subr.bf16.mxu0 %v496
  %699 = vmatpush1.bf16.msra.mxu0 %v495
  %700 = vmatprep.subr.bf16.mxu0 %v498
  %701 = vmatpush1.bf16.msra.mxu0 %v497
  %702 = vmatprep.mubr.bf16.mxu0 %v36
  %703 = vmatmul.mubr.bf16.gmra.mrb[0].mxu0 %v35
  %v704 = vpop.f32.mrb[0].mxu0
  %v705 = vadd.f32 %v662, %v704
  %v706 = vpop.f32.mrb[0].mxu0
  %v707 = vadd.f32 %v664, %v706
  %v708 = vpop.f32.mrb[0].mxu0
  %v709 = vadd.f32 %v666, %v708
  %v710 = vpop.f32.mrb[0].mxu0
  %v711 = vadd.f32 %v668, %v710
  %712 = vdwg.mxu0
  %713 = vmatprep.subr.bf16.mxu0 %v500
  %714 = vmatpush1.bf16.msra.mxu0 %v499
  %715 = vmatprep.subr.bf16.mxu0 %v502
  %716 = vmatpush1.bf16.msra.mxu0 %v501
  %717 = vmatprep.subr.bf16.mxu0 %v504
  %718 = vmatpush1.bf16.msra.mxu0 %v503
  %719 = vmatprep.subr.bf16.mxu0 %v506
  %720 = vmatpush1.bf16.msra.mxu0 %v505
  %721 = vmatprep.subr.bf16.mxu0 %v508
  %722 = vmatpush1.bf16.msra.mxu0 %v507
  %723 = vmatprep.subr.bf16.mxu0 %v510
  %724 = vmatpush1.bf16.msra.mxu0 %v509
  %725 = vmatprep.subr.bf16.mxu0 %v512
  %726 = vmatpush1.bf16.msra.mxu0 %v511
  %727 = vmatprep.subr.bf16.mxu0 %v514
  %728 = vmatpush1.bf16.msra.mxu0 %v513
  %729 = vmatprep.subr.bf16.mxu0 %v516
  %730 = vmatpush1.bf16.msra.mxu0 %v515
  %731 = vmatprep.subr.bf16.mxu0 %v518
  %732 = vmatpush1.bf16.msra.mxu0 %v517
  %733 = vmatprep.subr.bf16.mxu0 %v520
  %734 = vmatpush1.bf16.msra.mxu0 %v519
  %735 = vmatprep.subr.bf16.mxu0 %v522
  %736 = vmatpush1.bf16.msra.mxu0 %v521
  %737 = vmatprep.subr.bf16.mxu0 %v524
  %738 = vmatpush1.bf16.msra.mxu0 %v523
  %739 = vmatprep.subr.bf16.mxu0 %v526
  %740 = vmatpush1.bf16.msra.mxu0 %v525
  %741 = vmatprep.subr.bf16.mxu0 %v528
  %742 = vmatpush1.bf16.msra.mxu0 %v527
  %743 = vmatprep.subr.bf16.mxu0 %v530
  %744 = vmatpush1.bf16.msra.mxu0 %v529
  %745 = vmatprep.mubr.bf16.mxu0 %v38
  %746 = vmatmul.mubr.bf16.gmra.mrb[0].mxu0 %v37
  %v747 = vpop.f32.mrb[0].mxu0
  %v748 = vadd.f32 %v705, %v747
  %v749 = vpop.f32.mrb[0].mxu0
  %v750 = vadd.f32 %v707, %v749
  %v751 = vpop.f32.mrb[0].mxu0
  %v752 = vadd.f32 %v709, %v751
  %v753 = vpop.f32.mrb[0].mxu0
  %v754 = vadd.f32 %v711, %v753
  %755 = vdwg.mxu0
  %v756 = vmax.f32 %v748, 0.0
  %v757 = vmax.f32 %v750, 0.0
  %v758 = vmax.f32 %v752, 0.0
  %v759 = vmax.f32 %v754, 0.0
  %v760 = vpack.c.bf16 %v758, %v756
  %v761 = vpack.c.bf16 %v759, %v757
  %v762 = vld [vmem:[%s3] sm:$0xf]
  %v763 = vld [vmem:[%s3 + $0x4] sm:$0xf]
  %v764 = vld [vmem:[%s3 + $0x8] sm:$0xf]
  %v765 = vld [vmem:[%s3 + $0xc] sm:$0xf]
  %v766 = vld [vmem:[%s3 + $0x10] sm:$0xf]
  %v767 = vld [vmem:[%s3 + $0x14] sm:$0xf]
  %v768 = vld [vmem:[%s3 + $0x18] sm:$0xf]
  %v769 = vld [vmem:[%s3 + $0x1c] sm:$0xf]
  %v770 = vld [vmem:[%s3 + $0x20] sm:$0xf]
  %v771 = vld [vmem:[%s3 + $0x24] sm:$0xf]
  %v772 = vld [vmem:[%s3 + $0x28] sm:$0xf]
  %v773 = vld [vmem:[%s3 + $0x2c] sm:$0xf]
  %v774 = vld [vmem:[%s3 + $0x30] sm:$0xf]
  %v775 = vld [vmem:[%s3 + $0x34] sm:$0xf]
  %v776 = vld [vmem:[%s3 + $0x38] sm:$0xf]
  %v777 = vld [vmem:[%s3 + $0x3c] sm:$0xf]
  %v778 = vld [vmem:[%s3 + $0x40] sm:$0xf]
  %v779 = vld [vmem:[%s3 + $0x44] sm:$0xf]
  %v780 = vld [vmem:[%s3 + $0x48] sm:$0xf]
  %v781 = vld [vmem:[%s3 + $0x4c] sm:$0xf]
  %v782 = vld [vmem:[%s3 + $0x50] sm:$0xf]
  %v783 = vld [vmem:[%s3 + $0x54] sm:$0xf]
  %v784 = vld [vmem:[%s3 + $0x58] sm:$0xf]
  %v785 = vld [vmem:[%s3 + $0x5c] sm:$0xf]
  %v786 = vld [vmem:[%s3 + $0x60] sm:$0xf]
  %v787 = vld [vmem:[%s3 + $0x64] sm:$0xf]
  %v788 = vld [vmem:[%s3 + $0x68] sm:$0xf]
  %v789 = vld [vmem:[%s3 + $0x6c] sm:$0xf]
  %v790 = vld [vmem:[%s3 + $0x70] sm:$0xf]
  %v791 = vld [vmem:[%s3 + $0x74] sm:$0xf]
  %v792 = vld [vmem:[%s3 + $0x78] sm:$0xf]
  %v793 = vld [vmem:[%s3 + $0x7c] sm:$0xf]
  %v794 = vld [vmem:[%s4] sm:$0x1]
  %v796 = vlaneseq
  %v797 = vshrl.u32 %v796, 7
  %v798 = vsub.s32 0, %v797
  %v799 = vrot.slane %v794, %v798
  %v833 = vunpack.c.l.b16 %v762
  %v834 = vunpack.c.l.b16 %v763
  %v835 = vunpack.c.l.b16 %v764
  %v836 = vunpack.c.l.b16 %v765
  %v837 = vunpack.c.l.b16 %v766
  %v838 = vunpack.c.l.b16 %v767
  %v839 = vunpack.c.l.b16 %v768
  %v840 = vunpack.c.l.b16 %v769
  %v841 = vunpack.c.l.b16 %v770
  %v842 = vunpack.c.l.b16 %v771
  %v843 = vunpack.c.l.b16 %v772
  %v844 = vunpack.c.l.b16 %v773
  %v845 = vunpack.c.l.b16 %v774
  %v846 = vunpack.c.l.b16 %v775
  %v847 = vunpack.c.l.b16 %v776
  %v848 = vunpack.c.l.b16 %v777
  %v849 = vunpack.c.l.b16 %v778
  %v850 = vunpack.c.l.b16 %v779
  %v851 = vunpack.c.l.b16 %v780
  %v852 = vunpack.c.l.b16 %v781
  %v853 = vunpack.c.l.b16 %v782
  %v854 = vunpack.c.l.b16 %v783
  %v855 = vunpack.c.l.b16 %v784
  %v856 = vunpack.c.l.b16 %v785
  %v857 = vunpack.c.l.b16 %v786
  %v858 = vunpack.c.l.b16 %v787
  %v859 = vunpack.c.l.b16 %v788
  %v860 = vunpack.c.l.b16 %v789
  %v861 = vunpack.c.l.b16 %v790
  %v862 = vunpack.c.l.b16 %v791
  %v863 = vunpack.c.l.b16 %v792
  %v864 = vunpack.c.l.b16 %v793
  %v865 = vpack.c.b16 %v834, %v833
  %v866 = vpack.c.b16 %v836, %v835
  %v867 = vpack.c.b16 %v838, %v837
  %v868 = vpack.c.b16 %v840, %v839
  %v869 = vpack.c.b16 %v842, %v841
  %v870 = vpack.c.b16 %v844, %v843
  %v871 = vpack.c.b16 %v846, %v845
  %v872 = vpack.c.b16 %v848, %v847
  %v873 = vpack.c.b16 %v850, %v849
  %v874 = vpack.c.b16 %v852, %v851
  %v875 = vpack.c.b16 %v854, %v853
  %v876 = vpack.c.b16 %v856, %v855
  %v877 = vpack.c.b16 %v858, %v857
  %v878 = vpack.c.b16 %v860, %v859
  %v879 = vpack.c.b16 %v862, %v861
  %v880 = vpack.c.b16 %v864, %v863
  %897 = vmatprep.subr.bf16.mxu0 0
  %898 = vmatpush1.bf16.msra.mxu0 %v865
  %899 = vmatprep.subr.bf16.mxu0 0
  %900 = vmatpush1.bf16.msra.mxu0 %v866
  %901 = vmatprep.subr.bf16.mxu0 0
  %902 = vmatpush1.bf16.msra.mxu0 %v867
  %903 = vmatprep.subr.bf16.mxu0 0
  %904 = vmatpush1.bf16.msra.mxu0 %v868
  %905 = vmatprep.subr.bf16.mxu0 0
  %906 = vmatpush1.bf16.msra.mxu0 %v869
  %907 = vmatprep.subr.bf16.mxu0 0
  %908 = vmatpush1.bf16.msra.mxu0 %v870
  %909 = vmatprep.subr.bf16.mxu0 0
  %910 = vmatpush1.bf16.msra.mxu0 %v871
  %911 = vmatprep.subr.bf16.mxu0 0
  %912 = vmatpush1.bf16.msra.mxu0 %v872
  %913 = vmatprep.subr.bf16.mxu0 0
  %914 = vmatpush1.bf16.msra.mxu0 %v873
  %915 = vmatprep.subr.bf16.mxu0 0
  %916 = vmatpush1.bf16.msra.mxu0 %v874
  %917 = vmatprep.subr.bf16.mxu0 0
  %918 = vmatpush1.bf16.msra.mxu0 %v875
  %919 = vmatprep.subr.bf16.mxu0 0
  %920 = vmatpush1.bf16.msra.mxu0 %v876
  %921 = vmatprep.subr.bf16.mxu0 0
  %922 = vmatpush1.bf16.msra.mxu0 %v877
  %923 = vmatprep.subr.bf16.mxu0 0
  %924 = vmatpush1.bf16.msra.mxu0 %v878
  %925 = vmatprep.subr.bf16.mxu0 0
  %926 = vmatpush1.bf16.msra.mxu0 %v879
  %927 = vmatprep.subr.bf16.mxu0 0
  %928 = vmatpush1.bf16.msra.mxu0 %v880
  %929 = vmatprep.mubr.bf16.mxu0 %v761
  %930 = vmatmul.mubr.bf16.gmra.mrb[0].mxu0 %v760
  %v931 = vpop.f32.mrb[0].mxu0
  %v932 = vadd.f32 %v799, %v931
  %v933 = vpop.f32.mrb[0].mxu0
  %v934 = vpop.f32.mrb[0].mxu0
  %v935 = vadd.f32 %v799, %v934
  %v936 = vpop.f32.mrb[0].mxu0
  %937 = vdwg.mxu0
  %v938 = vpack.c.bf16 %v935, %v932
  %v940 = vunpack.c.l.b16 %v938
  %v941 = vunpack.c.h.b16 %v938
  %v942 = vpack.c.b16 %v940, %v940
  %v943 = vpack.c.b16 %v941, %v941
  %946 = vst [vmem:[%s5] sm:$0xf] %v942
  %947 = vst [vmem:[%s5 + $0x4] sm:$0xf] %v943
  // Predicated region
  $region22: #{emotion_classifier_forward.1} parent=0 // pred_check
    _
  $region23: #{emotion_classifier_forward.1} parent=0 // pred_check_branch
    %949 = sbr.rel (0) target = $region25
  $region24: #{emotion_classifier_forward.1} parent=0 // pred_region
    _
  $region25: #{emotion_classifier_forward.1} parent=0 // pred_fallthru
    _
  // Predicated region
  $region26: #{emotion_classifier_forward.1} parent=0 // pred_check
    _
  $region27: #{emotion_classifier_forward.1} parent=0 // pred_check_branch
    %951 = sbr.rel (0) target = $region29
  $region28: #{emotion_classifier_forward.1} parent=0 // pred_region
    _
  $region29: #{emotion_classifier_forward.1} parent=0 // pred_fallthru
    _

</llo_original>
